<compile_context>
chip_gen: v7x
topology: tpu7x:2x2x1
jax: 0.10.0
libtpu: 0.0.40
codegen_flags: <defaults>
</compile_context>

<pallas_src>
import jax
import jax.numpy as jnp
from jax.experimental import pallas as pl
from jax.experimental.pallas import tpu as pltpu


def _sigmoid_c_kernel(c_ref, x_ref, o_ref):
    # c_ref: (1, 1) scalar parameter in SMEM
    # x_ref / o_ref: (block_rows, lanes) lane-dense tiles in VMEM
    c = c_ref[0, 0].astype(jnp.float32)
    z = x_ref[...].astype(jnp.float32) + c          # VPU add (f32 in vregs)
    o_ref[...] = jax.nn.sigmoid(z).astype(o_ref.dtype)  # EUP exp; cast back on store


def _pick_lanes(total):
    # widest lane dimension (multiple of 128) that divides the flattened size
    for lanes in (4096, 2048, 1024, 512, 256, 128):
        if total % lanes == 0:
            return lanes
    return None


def sigmoid_c(x, c_param, *, target_block_bytes=2 * 1024 * 1024):
    """Computes sigmoid(c_param + x) with a single Pallas TPU kernel.

    Works for any shape/float dtype; keeps I/O in the input dtype.
    """
    orig_shape = x.shape
    dtype = x.dtype
    total = x.size

    lanes = _pick_lanes(total)
    pad_elems = 0
    if lanes is None:
        # Rare ragged case: pad the flat vector up to a multiple of 128 lanes.
        lanes = 128
        pad_elems = (-total) % lanes

    flat = x.reshape(-1)
    if pad_elems:
        flat = jnp.pad(flat, (0, pad_elems))
    rows = flat.size // lanes
    x2 = flat.reshape(rows, lanes)

    # Row-block size: ~2 MiB per buffer (in+out, double-buffered => ~8 MiB VMEM),
    # which fits the default scoped-VMEM budget on v5e/v6e/v7x.
    itemsize = jnp.dtype(dtype).itemsize
    block_rows = max(1, target_block_bytes // (lanes * itemsize))
    if block_rows >= rows:
        block_rows = rows                       # single full-extent block
    else:
        block_rows = max(8, (block_rows // 8) * 8)   # keep sublane-aligned

    grid = (pl.cdiv(rows, block_rows),)

    c2 = jnp.asarray(c_param, dtype=jnp.float32).reshape(1, 1)

    out = pl.pallas_call(
        _sigmoid_c_kernel,
        out_shape=jax.ShapeDtypeStruct((rows, lanes), dtype),
        grid=grid,
        in_specs=[
            pl.BlockSpec(memory_space=pltpu.SMEM),                 # scalar C
            pl.BlockSpec((block_rows, lanes), lambda i: (i, 0)),   # x tile
        ],
        out_specs=pl.BlockSpec((block_rows, lanes), lambda i: (i, 0)),
        compiler_params=pltpu.CompilerParams(
            dimension_semantics=("parallel",),
            vmem_limit_bytes=32 * 1024 * 1024,
        ),
    )(c2, x2)

    out = out.reshape(-1)
    if pad_elems:
        out = out[:total]
    return out.reshape(orig_shape)


if __name__ == "__main__":
    key = jax.random.PRNGKey(0)
    # NCHW input, matching the PyTorch module's usage convention
    x = jax.random.normal(key, (2, 4, 16, 16), dtype=jnp.float32)

    # Deterministic parameter (module default C = 0.0; use 0.5 so the
    # parameter's effect is visible in the check).
    C = jnp.float32(0.5)

    y = sigmoid_c(x, C)
    y = jax.block_until_ready(y)

    # Reference check in plain JAX
    y_ref = jax.nn.sigmoid(C + x)
    assert y.shape == x.shape and y.dtype == x.dtype
    assert jnp.allclose(y, y_ref, atol=1e-6, rtol=1e-6)

    print("KERNEL_OK")
</pallas_src>

<mosaic_0001>
module attributes {stable_mosaic.version = 11 : i64} {
  func.func @_sigmoid_c_kernel(%arg0: i32, %arg1: memref<1x1xf32, #tpu.memory_space<smem>>, %arg2: memref<1x2048xf32, #tpu.memory_space<vmem>>, %arg3: memref<1x2048xf32, #tpu.memory_space<vmem>>) attributes {dimension_semantics = [#tpu.dimension_semantics<parallel>], iteration_bounds = array<i64: 1>, scalar_prefetch = 0 : i64, scratch_operands = 0 : i64, tpu.core_type = #tpu.core_type<tc>, window_params = [{transform_indices = @transform_0, window_bounds = array<i64: 1, 1>}, {transform_indices = @transform_1, window_bounds = array<i64: 1, 2048>}, {transform_indices = @transform_2, window_bounds = array<i64: 1, 2048>}]} {
    %c0 = arith.constant 0 : index
    %c0_0 = arith.constant 0 : index
    %0 = memref.load %arg1[%c0, %c0_0] : memref<1x1xf32, #tpu.memory_space<smem>>
    %c0_1 = arith.constant 0 : index
    %c0_2 = arith.constant 0 : index
    %1 = vector.load %arg2[%c0_1, %c0_2] : memref<1x2048xf32, #tpu.memory_space<vmem>>, vector<1x2048xf32>
    %2 = vector.broadcast %0 : f32 to vector<1x2048xf32>
    %3 = arith.addf %1, %2 : vector<1x2048xf32>
    %4 = arith.negf %3 : vector<1x2048xf32>
    %5 = math.exp %4 : vector<1x2048xf32>
    %cst = arith.constant 1.000000e+00 : f32
    %6 = vector.broadcast %cst : f32 to vector<1x2048xf32>
    %7 = arith.addf %6, %5 : vector<1x2048xf32>
    %8 = arith.divf %6, %7 : vector<1x2048xf32>
    %c0_3 = arith.constant 0 : index
    %c0_4 = arith.constant 0 : index
    %9 = vector.load %arg3[%c0_3, %c0_4] : memref<1x2048xf32, #tpu.memory_space<vmem>>, vector<1x2048xf32>
    tpu.vector_store %arg3[%c0_3, %c0_4], %8 {strides = array<i32>} : memref<1x2048xf32, #tpu.memory_space<vmem>>, vector<1x2048xf32>,
    return
  }
  func.func @transform_0(%arg0: i32) -> (i32, i32) {
    %c0_i32 = arith.constant 0 : i32
    %c0_i32_0 = arith.constant 0 : i32
    %c0_i32_1 = arith.constant 0 : i32
    return %c0_i32, %c0_i32_0 : i32, i32
  }
  func.func @transform_1(%arg0: i32) -> (i32, i32) {
    %c0_i32 = arith.constant 0 : i32
    %c0_i32_0 = arith.constant 0 : i32
    return %arg0, %c0_i32 : i32, i32
  }
  func.func @transform_2(%arg0: i32) -> (i32, i32) {
    %c0_i32 = arith.constant 0 : i32
    %c0_i32_0 = arith.constant 0 : i32
    return %arg0, %c0_i32 : i32, i32
  }
}

</mosaic_0001>

<llo_original>
// kernel: tpu_custom_call.1
$region0: #{tpu_custom_call.1}
  #allocation0 [shape = 'u32[]', space=smem, size = 0x4, offset = 0x4, fixed_abs, tag = 'smem constant byte address 0x4 - core index']
  #allocation1 [shape = 'u32[144,128]{1,0:T(1,128)}', space=vmem, size = 0x12000, scoped, tag = 'internal scratch']
  #allocation2 [shape = 'f32[1,1]{1,0:T(1,128)S(6)}', space=smem, size = 0x200, scoped, tag = 'scoped memory for tpu_custom_call.1']
  %s0 = inlined_call_operand.<no memory space> [shape: f32[1,1], index: 0, kind: input, shape index: {}]
  %s1 = inlined_call_operand.hbm [shape: f32[1,2048], index: 1, kind: input, shape index: {}]
  %s2 = inlined_call_operand.hbm [shape: f32[1,2048], index: 2, kind: output, shape index: {}]
  %s3 = sld [smem:[#allocation0]]
  $region22: #{tpu_custom_call.1} parent=0
    _
  %s5 = ssub.s32 1, %s3
  %s6 = scalar_select 0, %s5, %s3
  %7 = sst [smem:[#allocation2]] %s0
  $region1: #{tpu_custom_call.1} parent=0
    #allocation3 [shape = 'u8[8192]{0}', space=vmem, size = 0x2000, scoped, tag = 'input window, operand 1, single buffered']
    #allocation4 [shape = 's32[1]{0}', space=sflag, size = 0x4, scoped, tag = 'scoped memory for tpu_custom_call.1']
    #allocation5 [shape = 's32[1]{0}', space=sflag, size = 0x4, scoped, tag = 'scoped memory for tpu_custom_call.1']
    #allocation6 [shape = 'u8[8192]{0}', space=vmem, size = 0x2000, scoped, tag = 'output window, operand 0, single buffered']
    %8 = vsyncpa [#allocation4], 0
    %9 = vsyncpa [#allocation5], 0
    // Predicated region
    $region2: #{tpu_custom_call.1} parent=1 // pred_check
      _
    $region3: #{tpu_custom_call.1} parent=1 // pred_check_branch
      %11 = sbr.rel (0) target = $region5
    $region4: #{tpu_custom_call.1} parent=1 // pred_region
      _
    $region5: #{tpu_custom_call.1} parent=1 // pred_fallthru
      _
    // Predicated region
    $region6: #{tpu_custom_call.1} parent=1 // pred_check
      _
    $region7: #{tpu_custom_call.1} parent=1 // pred_check_branch
      %13 = sbr.rel (0) target = $region9
    $region8: #{tpu_custom_call.1} parent=1 // pred_region
      %s15 = ssub.s32 256, 256
      %16 = vsyncadd [#allocation4], %s15
      %s18 = sshll.u32 [#allocation3], 4
      %s19 = int_to_ptr.vmem [resolvable:$true] %s18
      %21 = dma.hbm_to_vmem [thread:$0]  %s1, 256, %s19, [#allocation4]
    $region9: #{tpu_custom_call.1} parent=1 // pred_fallthru
      _
    // Predicated region
    $region10: #{tpu_custom_call.1} parent=1 // pred_check
      _
    $region11: #{tpu_custom_call.1} parent=1 // pred_check_branch
      %23 = sbr.rel (0) target = $region13
    $region12: #{tpu_custom_call.1} parent=1 // pred_region
      %24 = dma.done [#allocation4], 256
    $region13: #{tpu_custom_call.1} parent=1 // pred_fallthru
      _
    %s25 = sld [smem:[#allocation2]]
    %v26 = vld [vmem:[#allocation3] sm:$0xff]
    %v27 = vld [vmem:[#allocation3 + $0x8] sm:$0xff]
    %v28 = vstv %s25
    %v29 = vadd.f32 %v26, %v28
    %v30 = vadd.f32 %v27, %v28
    %v31 = vxor.u32 %v29, 2147483648
    %v32 = vxor.u32 %v30, 2147483648
    %v33 = vmul.f32 %v31, 1.442695
    %v34 = vpow.pop %v33
    %v35 = vmul.f32 %v32, 1.442695
    %v36 = vpow.pop %v35
    %v37 = vadd.f32 %v34, 1.0
    %v38 = vadd.f32 %v36, 1.0
    %v39 = vrcp.pop %v37
    %v40 = vmul.f32 1.0, %v39
    %v41 = vrcp.pop %v38
    %v42 = vmul.f32 1.0, %v41
    %43 = vst [vmem:[#allocation6] sm:$0xff] %v40
    %44 = vst [vmem:[#allocation6 + $0x8] sm:$0xff] %v42
    // Predicated region
    $region14: #{tpu_custom_call.1} parent=1 // pred_check
      _
    $region15: #{tpu_custom_call.1} parent=1 // pred_check_branch
      %46 = sbr.rel (0) target = $region17
    $region16: #{tpu_custom_call.1} parent=1 // pred_region
      %s48 = ssub.s32 256, 256
      %49 = vsyncadd [#allocation5], %s48
      %s51 = sshll.u32 [#allocation6], 4
      %s52 = int_to_ptr.vmem [resolvable:$true] %s51
      %54 = dma.vmem_to_hbm [thread:$0]  %s52, 256, %s2, [#allocation5]
    $region17: #{tpu_custom_call.1} parent=1 // pred_fallthru
      _
    // Predicated region
    $region18: #{tpu_custom_call.1} parent=1 // pred_check
      _
    $region19: #{tpu_custom_call.1} parent=1 // pred_check_branch
      %56 = sbr.rel (0) target = $region21
    $region20: #{tpu_custom_call.1} parent=1 // pred_region
      %57 = dma.done [#allocation5], 256
    $region21: #{tpu_custom_call.1} parent=1 // pred_fallthru
      _
    %58 = vsyncpa [#allocation4], 1
    %59 = vsyncpa [#allocation5], 1

</llo_original>
